<compile_context>
chip_gen: v7x
topology: tpu7x:2x2x1
jax: 0.10.0
libtpu: 0.0.40
codegen_flags: <defaults>
</compile_context>

<pallas_src>
import functools

import jax
import jax.numpy as jnp
import numpy as np
from jax.experimental import pallas as pl
from jax.experimental.pallas import tpu as pltpu

LEAKY_RELU_SLOPE = 0.2   # config.LEAKY_RELU_SLOPE in the reference repo
BN_EPS = 1e-5


def _round_up(x, m):
    return (x + m - 1) // m * m


# ---------------------------------------------------------------------------
# Phase 1: conv (im2col matmul) + per-channel stats + BN fold on last step
# ---------------------------------------------------------------------------
def conv_stats_kernel(x_ref, w_ref, gamma_ref, beta_ref,
                      y_ref, scale_ref, shift_ref,
                      sum_sc, sq_sc, *, count):
    # x_ref: (tm, Kd_pad) bf16 im2col patches; w_ref: (Kd_pad, C_pad) bf16
    # y_ref: (tm, C_pad) f32 conv output tile
    # scale_ref/shift_ref: (1, C_pad) f32, written once at the last grid step
    # sum_sc/sq_sc: (1, C_pad) f32 VMEM scratch accumulators
    y = jnp.dot(x_ref[...], w_ref[...], preferred_element_type=jnp.float32)
    y_ref[...] = y

    @pl.when(pl.program_id(0) == 0)
    def _init():
        sum_sc[...] = jnp.zeros_like(sum_sc)
        sq_sc[...] = jnp.zeros_like(sq_sc)

    # Zero-padded rows / channels contribute exactly 0 (no conv bias), so no
    # masking is needed; dividing by the true row count `count` is exact.
    sum_sc[...] += jnp.sum(y, axis=0, keepdims=True)
    sq_sc[...] += jnp.sum(y * y, axis=0, keepdims=True)

    @pl.when(pl.program_id(0) == pl.num_programs(0) - 1)
    def _finalize():
        inv_n = jnp.float32(1.0 / count)
        mean = sum_sc[...] * inv_n
        var = jnp.maximum(sq_sc[...] * inv_n - mean * mean, 0.0)  # biased var
        scale = gamma_ref[...] * jax.lax.rsqrt(var + BN_EPS)
        scale_ref[...] = scale
        shift_ref[...] = beta_ref[...] - mean * scale


# ---------------------------------------------------------------------------
# Phase 2: BatchNorm (per-channel scale/shift) + LeakyReLU
# ---------------------------------------------------------------------------
def bn_lrelu_kernel(y_ref, scale_ref, shift_ref, o_ref, *, slope):
    z = y_ref[...] * scale_ref[...] + shift_ref[...]
    o_ref[...] = jnp.where(z >= 0, z, slope * z)


def _im2col(x, K, stride):
    # x: (N, C, H, W) -> (N*Ho*Wo, C*K*K) with column order (c, ki, kj)
    N, C, H, W = x.shape
    Ho = (H - K) // stride + 1
    Wo = (W - K) // stride + 1
    cols = []
    for ki in range(K):
        for kj in range(K):
            cols.append(x[:, :, ki:ki + stride * Ho:stride,
                            kj:kj + stride * Wo:stride])   # (N, C, Ho, Wo)
    patch = jnp.stack(cols, axis=2)                  # (N, C, K*K, Ho, Wo)
    patch = patch.transpose(0, 3, 4, 1, 2)           # (N, Ho, Wo, C, K*K)
    return patch.reshape(N * Ho * Wo, C * K * K), Ho, Wo


def disc_block(x, weight, bias, gamma, beta, *, stride=2):
    """Fused Conv2d -> BatchNorm2d (batch statistics) -> LeakyReLU.

    x: (N, C_in, H, W); weight: (C_out, C_in, K, K); bias/gamma/beta: (C_out,)
    """
    # The conv bias shifts every value of a channel equally; BatchNorm's mean
    # subtraction cancels it exactly and it does not affect the variance.
    del bias

    N, C_in, H, W = x.shape
    C_out, _, K, _ = weight.shape

    # Cast to bf16 BEFORE im2col so the materialized patch matrix is
    # half-width in HBM (same values as casting after; im2col only rearranges).
    x_col, Ho, Wo = _im2col(x.astype(jnp.bfloat16), K, stride)   # (M, Kd)
    M, Kd = x_col.shape
    w_col = weight.astype(jnp.bfloat16).reshape(C_out, C_in * K * K).T

    # Tile sizes: big M-tiles to fill the MXU and amortize per-step overhead,
    # lane dims padded to 128.
    tm = 512 if M >= 512 else _round_up(M, 8)
    M_pad = _round_up(M, tm)
    Kd_pad = _round_up(Kd, 128)
    C_pad = _round_up(C_out, 128)
    n_m = M_pad // tm

    x_p = jnp.pad(x_col, ((0, M_pad - M), (0, Kd_pad - Kd)))
    w_p = jnp.pad(w_col, ((0, Kd_pad - Kd), (0, C_pad - C_out)))
    gamma_p = jnp.pad(gamma.astype(jnp.float32).reshape(1, -1),
                      ((0, 0), (0, C_pad - C_out)))
    beta_p = jnp.pad(beta.astype(jnp.float32).reshape(1, -1),
                     ((0, 0), (0, C_pad - C_out)))

    vmem_lim = 32 * 1024 * 1024   # explicit, portable across v5e/v6e/v7x

    # ---- Phase 1: tiled conv + stats + BN fold ----------------------------
    kernel1 = functools.partial(conv_stats_kernel, count=float(M))
    y_p, scale, shift = pl.pallas_call(
        kernel1,
        out_shape=(
            jax.ShapeDtypeStruct((M_pad, C_pad), jnp.float32),
            jax.ShapeDtypeStruct((1, C_pad), jnp.float32),
            jax.ShapeDtypeStruct((1, C_pad), jnp.float32),
        ),
        grid=(n_m,),
        in_specs=[
            pl.BlockSpec((tm, Kd_pad), lambda i: (i, 0)),
            pl.BlockSpec((Kd_pad, C_pad), lambda i: (0, 0)),
            pl.BlockSpec((1, C_pad), lambda i: (0, 0)),
            pl.BlockSpec((1, C_pad), lambda i: (0, 0)),
        ],
        out_specs=(
            pl.BlockSpec((tm, C_pad), lambda i: (i, 0)),
            pl.BlockSpec((1, C_pad), lambda i: (0, 0)),
            pl.BlockSpec((1, C_pad), lambda i: (0, 0)),
        ),
        scratch_shapes=[pltpu.VMEM((1, C_pad), jnp.float32),
                        pltpu.VMEM((1, C_pad), jnp.float32)],
        compiler_params=pltpu.CompilerParams(
            dimension_semantics=("arbitrary",),     # stats accumulator
            vmem_limit_bytes=vmem_lim),
    )(x_p, w_p, gamma_p, beta_p)

    # ---- Phase 2: normalize + LeakyReLU (megacore-parallel over M-tiles) ---
    kernel2 = functools.partial(bn_lrelu_kernel, slope=LEAKY_RELU_SLOPE)
    out_p = pl.pallas_call(
        kernel2,
        out_shape=jax.ShapeDtypeStruct((M_pad, C_pad), jnp.float32),
        grid=(n_m,),
        in_specs=[
            pl.BlockSpec((tm, C_pad), lambda i: (i, 0)),
            pl.BlockSpec((1, C_pad), lambda i: (0, 0)),
            pl.BlockSpec((1, C_pad), lambda i: (0, 0)),
        ],
        out_specs=pl.BlockSpec((tm, C_pad), lambda i: (i, 0)),
        compiler_params=pltpu.CompilerParams(
            dimension_semantics=("parallel",),
            vmem_limit_bytes=vmem_lim),
    )(y_p, scale, shift)

    out = out_p[:M, :C_out]                          # (N*Ho*Wo, C_out)
    # Kept only to match PyTorch's NCHW output layout.
    out = out.reshape(N, Ho, Wo, C_out).transpose(0, 3, 1, 2)
    return out


def _reference(x, weight, bias, gamma, beta, *, stride=2, matmul_bf16=False):
    if matmul_bf16:
        xc, wc = x.astype(jnp.bfloat16), weight.astype(jnp.bfloat16)
    else:
        xc, wc = x, weight
    y = jax.lax.conv_general_dilated(
        xc, wc, window_strides=(stride, stride), padding="VALID",
        dimension_numbers=("NCHW", "OIHW", "NCHW"),
        preferred_element_type=jnp.float32)
    y = y + bias.reshape(1, -1, 1, 1)
    mean = y.mean(axis=(0, 2, 3), keepdims=True)
    var = ((y - mean) ** 2).mean(axis=(0, 2, 3), keepdims=True)   # biased
    xhat = (y - mean) / jnp.sqrt(var + BN_EPS)
    z = gamma.reshape(1, -1, 1, 1) * xhat + beta.reshape(1, -1, 1, 1)
    return jnp.where(z >= 0, z, LEAKY_RELU_SLOPE * z)


if __name__ == "__main__":
    # Small shapes consistent with the module: N=2, C_in=4, H=W=16, C_out=8, K=4, stride=2
    N, C_in, H, W = 2, 4, 16, 16
    C_out, K, stride = 8, 4, 2

    key = jax.random.PRNGKey(0)
    kx, kw, kb, kg, kbt = jax.random.split(key, 5)
    x = jax.random.normal(kx, (N, C_in, H, W), jnp.float32)
    weight = jax.random.normal(kw, (C_out, C_in, K, K), jnp.float32) * 0.1
    bias = jax.random.normal(kb, (C_out,), jnp.float32) * 0.1
    gamma = 1.0 + 0.1 * jax.random.normal(kg, (C_out,), jnp.float32)
    beta = 0.1 * jax.random.normal(kbt, (C_out,), jnp.float32)

    out = disc_block(x, weight, bias, gamma, beta, stride=stride)
    out = jax.block_until_ready(out)

    # Tight check against a reference using the same bf16 MXU operands
    # (includes the conv bias, verifying the bias-cancellation is exact).
    ref16 = _reference(x, weight, bias, gamma, beta, stride=stride, matmul_bf16=True)
    assert out.shape == ref16.shape, (out.shape, ref16.shape)
    np.testing.assert_allclose(np.asarray(out), np.asarray(ref16),
                               rtol=2e-3, atol=2e-3)

    # Loose check against the full-f32 PyTorch-semantics reference (the only
    # difference is bf16 rounding of the matmul operands).
    ref32 = _reference(x, weight, bias, gamma, beta, stride=stride, matmul_bf16=False)
    np.testing.assert_allclose(np.asarray(out), np.asarray(ref32),
                               rtol=5e-2, atol=5e-2)

    print("KERNEL_OK")
</pallas_src>

<mosaic_0001>
module attributes {stable_mosaic.version = 11 : i64} {
  func.func @conv_stats_kernel(%arg0: i32, %arg1: memref<104x128xbf16, #tpu.memory_space<vmem>>, %arg2: memref<128x128xbf16, #tpu.memory_space<vmem>>, %arg3: memref<1x128xf32, #tpu.memory_space<vmem>>, %arg4: memref<1x128xf32, #tpu.memory_space<vmem>>, %arg5: memref<104x128xf32, #tpu.memory_space<vmem>>, %arg6: memref<1x128xf32, #tpu.memory_space<vmem>>, %arg7: memref<1x128xf32, #tpu.memory_space<vmem>>, %arg8: memref<1x128xf32, #tpu.memory_space<vmem>>, %arg9: memref<1x128xf32, #tpu.memory_space<vmem>>) attributes {dimension_semantics = [#tpu.dimension_semantics<arbitrary>], iteration_bounds = array<i64: 1>, scalar_prefetch = 0 : i64, scratch_operands = 2 : i64, tpu.core_type = #tpu.core_type<tc>, window_params = [{transform_indices = @transform_0, window_bounds = array<i64: 104, 128>}, {pipeline_mode = #tpu.pipeline_mode<synchronous>, transform_indices = @transform_1, window_bounds = array<i64: 128, 128>}, {pipeline_mode = #tpu.pipeline_mode<synchronous>, transform_indices = @transform_2, window_bounds = array<i64: 1, 128>}, {pipeline_mode = #tpu.pipeline_mode<synchronous>, transform_indices = @transform_3, window_bounds = array<i64: 1, 128>}, {transform_indices = @transform_4, window_bounds = array<i64: 104, 128>}, {pipeline_mode = #tpu.pipeline_mode<synchronous>, transform_indices = @transform_5, window_bounds = array<i64: 1, 128>}, {pipeline_mode = #tpu.pipeline_mode<synchronous>, transform_indices = @transform_6, window_bounds = array<i64: 1, 128>}]} {
    %c0 = arith.constant 0 : index
    %c0_0 = arith.constant 0 : index
    %0 = vector.load %arg1[%c0, %c0_0] : memref<104x128xbf16, #tpu.memory_space<vmem>>, vector<104x128xbf16>
    %c0_1 = arith.constant 0 : index
    %c0_2 = arith.constant 0 : index
    %1 = vector.load %arg2[%c0_1, %c0_2] : memref<128x128xbf16, #tpu.memory_space<vmem>>, vector<128x128xbf16>
    %cst = arith.constant dense<0.000000e+00> : vector<104x128xf32>
    %2 = tpu.matmul %0, %1, %cst {dimension_numbers = #tpu.dot_dimension_numbers<[1], [0], [0], [1], [0, 0, 1, 1], [], []>} : vector<104x128xbf16>, vector<128x128xbf16>, vector<104x128xf32> -> vector<104x128xf32>
    %c0_3 = arith.constant 0 : index
    %c0_4 = arith.constant 0 : index
    %3 = vector.load %arg5[%c0_3, %c0_4] : memref<104x128xf32, #tpu.memory_space<vmem>>, vector<104x128xf32>
    tpu.vector_store %arg5[%c0_3, %c0_4], %2 {strides = array<i32>} : memref<104x128xf32, #tpu.memory_space<vmem>>, vector<104x128xf32>,
    %c0_i32 = arith.constant 0 : i32
    %4 = arith.cmpi eq, %arg0, %c0_i32 : i32
    %5 = arith.extui %4 : i1 to i32
    %c0_i32_5 = arith.constant 0 : i32
    %6 = arith.cmpi ne, %5, %c0_i32_5 : i32
    scf.if %6 {
      %cst_18 = arith.constant 0.000000e+00 : f32
      %21 = vector.broadcast %cst_18 : f32 to vector<1x128xf32>
      %c0_19 = arith.constant 0 : index
      %c0_20 = arith.constant 0 : index
      %22 = vector.load %arg8[%c0_19, %c0_20] : memref<1x128xf32, #tpu.memory_space<vmem>>, vector<1x128xf32>
      tpu.vector_store %arg8[%c0_19, %c0_20], %21 {strides = array<i32>} : memref<1x128xf32, #tpu.memory_space<vmem>>, vector<1x128xf32>,
      %cst_21 = arith.constant 0.000000e+00 : f32
      %23 = vector.broadcast %cst_21 : f32 to vector<1x128xf32>
      %c0_22 = arith.constant 0 : index
      %c0_23 = arith.constant 0 : index
      %24 = vector.load %arg9[%c0_22, %c0_23] : memref<1x128xf32, #tpu.memory_space<vmem>>, vector<1x128xf32>
      tpu.vector_store %arg9[%c0_22, %c0_23], %23 {strides = array<i32>} : memref<1x128xf32, #tpu.memory_space<vmem>>, vector<1x128xf32>,
    } else {
    }
    %c0_6 = arith.constant 0 : index
    %c0_7 = arith.constant 0 : index
    %7 = vector.load %arg8[%c0_6, %c0_7] : memref<1x128xf32, #tpu.memory_space<vmem>>, vector<1x128xf32>
    %cst_8 = arith.constant dense<0.000000e+00> : vector<128xf32>
    %8 = vector.multi_reduction <add>, %2, %cst_8 [0] : vector<104x128xf32> to vector<128xf32>
    %9 = vector.shape_cast %8 : vector<128xf32> to vector<1x128xf32>
    %10 = arith.addf %7, %9 : vector<1x128xf32>
    %c0_9 = arith.constant 0 : index
    %c0_10 = arith.constant 0 : index
    %11 = vector.load %arg8[%c0_9, %c0_10] : memref<1x128xf32, #tpu.memory_space<vmem>>, vector<1x128xf32>
    tpu.vector_store %arg8[%c0_9, %c0_10], %10 {strides = array<i32>} : memref<1x128xf32, #tpu.memory_space<vmem>>, vector<1x128xf32>,
    %c0_11 = arith.constant 0 : index
    %c0_12 = arith.constant 0 : index
    %12 = vector.load %arg9[%c0_11, %c0_12] : memref<1x128xf32, #tpu.memory_space<vmem>>, vector<1x128xf32>
    %13 = arith.mulf %2, %2 : vector<104x128xf32>
    %cst_13 = arith.constant dense<0.000000e+00> : vector<128xf32>
    %14 = vector.multi_reduction <add>, %13, %cst_13 [0] : vector<104x128xf32> to vector<128xf32>
    %15 = vector.shape_cast %14 : vector<128xf32> to vector<1x128xf32>
    %16 = arith.addf %12, %15 : vector<1x128xf32>
    %c0_14 = arith.constant 0 : index
    %c0_15 = arith.constant 0 : index
    %17 = vector.load %arg9[%c0_14, %c0_15] : memref<1x128xf32, #tpu.memory_space<vmem>>, vector<1x128xf32>
    tpu.vector_store %arg9[%c0_14, %c0_15], %16 {strides = array<i32>} : memref<1x128xf32, #tpu.memory_space<vmem>>, vector<1x128xf32>,
    %c0_i32_16 = arith.constant 0 : i32
    %18 = arith.cmpi eq, %arg0, %c0_i32_16 : i32
    %19 = arith.extui %18 : i1 to i32
    %c0_i32_17 = arith.constant 0 : i32
    %20 = arith.cmpi ne, %19, %c0_i32_17 : i32
    scf.if %20 {
      %c0_18 = arith.constant 0 : index
      %c0_19 = arith.constant 0 : index
      %21 = vector.load %arg8[%c0_18, %c0_19] : memref<1x128xf32, #tpu.memory_space<vmem>>, vector<1x128xf32>
      %cst_20 = arith.constant 0.0102040814 : f32
      %22 = vector.broadcast %cst_20 : f32 to vector<1x128xf32>
      %23 = arith.mulf %21, %22 : vector<1x128xf32>
      %c0_21 = arith.constant 0 : index
      %c0_22 = arith.constant 0 : index
      %24 = vector.load %arg9[%c0_21, %c0_22] : memref<1x128xf32, #tpu.memory_space<vmem>>, vector<1x128xf32>
      %cst_23 = arith.constant 0.0102040814 : f32
      %25 = vector.broadcast %cst_23 : f32 to vector<1x128xf32>
      %26 = arith.mulf %24, %25 : vector<1x128xf32>
      %27 = arith.mulf %23, %23 : vector<1x128xf32>
      %28 = arith.subf %26, %27 : vector<1x128xf32>
      %cst_24 = arith.constant 0.000000e+00 : f32
      %29 = vector.broadcast %cst_24 : f32 to vector<1x128xf32>
      %30 = arith.maximumf %28, %29 : vector<1x128xf32>
      %c0_25 = arith.constant 0 : index
      %c0_26 = arith.constant 0 : index
      %31 = vector.load %arg3[%c0_25, %c0_26] : memref<1x128xf32, #tpu.memory_space<vmem>>, vector<1x128xf32>
      %cst_27 = arith.constant 9.99999974E-6 : f32
      %32 = vector.broadcast %cst_27 : f32 to vector<1x128xf32>
      %33 = arith.addf %30, %32 : vector<1x128xf32>
      %34 = math.rsqrt %33 : vector<1x128xf32>
      %35 = arith.mulf %31, %34 : vector<1x128xf32>
      %c0_28 = arith.constant 0 : index
      %c0_29 = arith.constant 0 : index
      %36 = vector.load %arg6[%c0_28, %c0_29] : memref<1x128xf32, #tpu.memory_space<vmem>>, vector<1x128xf32>
      tpu.vector_store %arg6[%c0_28, %c0_29], %35 {strides = array<i32>} : memref<1x128xf32, #tpu.memory_space<vmem>>, vector<1x128xf32>,
      %c0_30 = arith.constant 0 : index
      %c0_31 = arith.constant 0 : index
      %37 = vector.load %arg4[%c0_30, %c0_31] : memref<1x128xf32, #tpu.memory_space<vmem>>, vector<1x128xf32>
      %38 = arith.mulf %23, %35 : vector<1x128xf32>
      %39 = arith.subf %37, %38 : vector<1x128xf32>
      %c0_32 = arith.constant 0 : index
      %c0_33 = arith.constant 0 : index
      %40 = vector.load %arg7[%c0_32, %c0_33] : memref<1x128xf32, #tpu.memory_space<vmem>>, vector<1x128xf32>
      tpu.vector_store %arg7[%c0_32, %c0_33], %39 {strides = array<i32>} : memref<1x128xf32, #tpu.memory_space<vmem>>, vector<1x128xf32>,
    } else {
    }
    return
  }
  func.func @transform_0(%arg0: i32) -> (i32, i32) {
    %c0_i32 = arith.constant 0 : i32
    %c0_i32_0 = arith.constant 0 : i32
    return %arg0, %c0_i32 : i32, i32
  }
  func.func @transform_1(%arg0: i32) -> (i32, i32) {
    %c0_i32 = arith.constant 0 : i32
    %c0_i32_0 = arith.constant 0 : i32
    %c0_i32_1 = arith.constant 0 : i32
    return %c0_i32, %c0_i32_0 : i32, i32
  }
  func.func @transform_2(%arg0: i32) -> (i32, i32) {
    %c0_i32 = arith.constant 0 : i32
    %c0_i32_0 = arith.constant 0 : i32
    %c0_i32_1 = arith.constant 0 : i32
    return %c0_i32, %c0_i32_0 : i32, i32
  }
  func.func @transform_3(%arg0: i32) -> (i32, i32) {
    %c0_i32 = arith.constant 0 : i32
    %c0_i32_0 = arith.constant 0 : i32
    %c0_i32_1 = arith.constant 0 : i32
    return %c0_i32, %c0_i32_0 : i32, i32
  }
  func.func @transform_4(%arg0: i32) -> (i32, i32) {
    %c0_i32 = arith.constant 0 : i32
    %c0_i32_0 = arith.constant 0 : i32
    return %arg0, %c0_i32 : i32, i32
  }
  func.func @transform_5(%arg0: i32) -> (i32, i32) {
    %c0_i32 = arith.constant 0 : i32
    %c0_i32_0 = arith.constant 0 : i32
    %c0_i32_1 = arith.constant 0 : i32
    return %c0_i32, %c0_i32_0 : i32, i32
  }
  func.func @transform_6(%arg0: i32) -> (i32, i32) {
    %c0_i32 = arith.constant 0 : i32
    %c0_i32_0 = arith.constant 0 : i32
    %c0_i32_1 = arith.constant 0 : i32
    return %c0_i32, %c0_i32_0 : i32, i32
  }
}

</mosaic_0001>

<llo_original>
// kernel: tpu_custom_call.1
$region0: #{tpu_custom_call.1}
  #allocation0 [shape = 'u32[]', space=smem, size = 0x4, offset = 0x4, fixed_abs, tag = 'smem constant byte address 0x4 - core index']
  #allocation1 [shape = 'u32[144,128]{1,0:T(1,128)}', space=vmem, size = 0x12000, scoped, tag = 'internal scratch']
  #allocation2 [shape = 'f32[1,128]{1,0:T(1,128)}', space=vmem, size = 0x200, scoped, tag = 'scratch operand']
  #allocation3 [shape = 'f32[1,128]{1,0:T(1,128)}', space=vmem, size = 0x200, scoped, tag = 'scratch operand']
  %s0 = inlined_call_operand.hbm [shape: bf16[104,128], index: 0, kind: input, shape index: {}]
  %s1 = inlined_call_operand.hbm [shape: bf16[128,128], index: 1, kind: input, shape index: {}]
  %s2 = inlined_call_operand.vmem [shape: f32[1,128], index: 2, kind: input, shape index: {}]
  %s3 = inlined_call_operand.vmem [shape: f32[1,128], index: 3, kind: input, shape index: {}]
  %s4 = inlined_call_operand.hbm [shape: f32[104,128], index: 4, kind: output, shape index: {0}]
  %s5 = inlined_call_operand.hbm [shape: f32[1,128], index: 5, kind: output, shape index: {1}]
  %s6 = inlined_call_operand.hbm [shape: f32[1,128], index: 6, kind: output, shape index: {2}]
  %7 = xla_tuple %s4, %s5, %s6
  %s8 = sld [smem:[#allocation0]]
  $region58: #{tpu_custom_call.1} parent=0
    _
  %s10 = ssub.s32 1, %s8
  %s11 = scalar_select 0, %s10, %s8
  $region1: #{tpu_custom_call.1} parent=0
    #allocation4 [shape = 'u8[26624]{0}', space=vmem, size = 0x6800, scoped, tag = 'input window, operand 0, single buffered']
    #allocation5 [shape = 's32[1]{0}', space=sflag, size = 0x4, scoped, tag = 'scoped memory for tpu_custom_call.1']
    #allocation6 [shape = 's32[1]{0}', space=sflag, size = 0x4, scoped, tag = 'scoped memory for tpu_custom_call.1']
    #allocation7 [shape = 'u8[32768]{0}', space=vmem, size = 0x8000, scoped, tag = 'input window, operand 1, single buffered']
    #allocation8 [shape = 's32[1]{0}', space=sflag, size = 0x4, scoped, tag = 'scoped memory for tpu_custom_call.1']
    #allocation9 [shape = 'u8[53248]{0}', space=vmem, size = 0xd000, scoped, tag = 'output window, operand 0, single buffered']
    #allocation10 [shape = 'u8[512]{0}', space=vmem, size = 0x400, scoped, tag = 'output window, operand 1, single buffered']
    #allocation11 [shape = 's32[1]{0}', space=sflag, size = 0x4, scoped, tag = 'scoped memory for tpu_custom_call.1']
    #allocation12 [shape = 'u8[512]{0}', space=vmem, size = 0x400, scoped, tag = 'output window, operand 2, single buffered']
    %12 = vsyncpa [#allocation5], 0
    %13 = vsyncpa [#allocation8], 0
    %14 = vsyncpa [#allocation6], 0
    %15 = vsyncpa [#allocation11], 0
    // Predicated region
    $region2: #{tpu_custom_call.1} parent=1 // pred_check
      _
    $region3: #{tpu_custom_call.1} parent=1 // pred_check_branch
      %17 = sbr.rel (0) target = $region5
    $region4: #{tpu_custom_call.1} parent=1 // pred_region
      %s19 = ssub.s32 832, 832
      %20 = vsyncadd [#allocation5], %s19
      %s21 = sshll.u32 [#allocation4], 4
      %s22 = int_to_ptr.vmem [resolvable:$true] %s21
      %27 = dma.hbm_to_vmem [thread:$0]  %s0, 832, %s22, [#allocation5], 64, 64, 4
    $region5: #{tpu_custom_call.1} parent=1 // pred_fallthru
      _
    // Predicated region
    $region6: #{tpu_custom_call.1} parent=1 // pred_check
      _
    $region7: #{tpu_custom_call.1} parent=1 // pred_check_branch
      %29 = sbr.rel (0) target = $region9
    $region8: #{tpu_custom_call.1} parent=1 // pred_region
      %s31 = ssub.s32 1024, 1024
      %32 = vsyncadd [#allocation8], %s31
      %s33 = sshll.u32 [#allocation7], 4
      %s34 = int_to_ptr.vmem [resolvable:$true] %s33
      %39 = dma.hbm_to_vmem [thread:$0]  %s1, 1024, %s34, [#allocation8], 64, 64, 4
    $region9: #{tpu_custom_call.1} parent=1 // pred_fallthru
      _
    // Predicated region
    $region10: #{tpu_custom_call.1} parent=1 // pred_check
      _
    $region11: #{tpu_custom_call.1} parent=1 // pred_check_branch
      %41 = sbr.rel (0) target = $region13
    $region12: #{tpu_custom_call.1} parent=1 // pred_region
      _
    $region13: #{tpu_custom_call.1} parent=1 // pred_fallthru
      _
    // Predicated region
    $region14: #{tpu_custom_call.1} parent=1 // pred_check
      _
    $region15: #{tpu_custom_call.1} parent=1 // pred_check_branch
      %43 = sbr.rel (0) target = $region17
    $region16: #{tpu_custom_call.1} parent=1 // pred_region
      _
    $region17: #{tpu_custom_call.1} parent=1 // pred_fallthru
      _
    // Predicated region
    $region18: #{tpu_custom_call.1} parent=1 // pred_check
      _
    $region19: #{tpu_custom_call.1} parent=1 // pred_check_branch
      %45 = sbr.rel (0) target = $region21
    $region20: #{tpu_custom_call.1} parent=1 // pred_region
      %46 = dma.done [#allocation5], 832
    $region21: #{tpu_custom_call.1} parent=1 // pred_fallthru
      _
    // Predicated region
    $region22: #{tpu_custom_call.1} parent=1 // pred_check
      _
    $region23: #{tpu_custom_call.1} parent=1 // pred_check_branch
      %48 = sbr.rel (0) target = $region25
    $region24: #{tpu_custom_call.1} parent=1 // pred_region
      %49 = dma.done [#allocation8], 1024
    $region25: #{tpu_custom_call.1} parent=1 // pred_fallthru
      _
    %v51 = vld [vmem:[#allocation4] sm:$0xf]
    %v52 = vld [vmem:[#allocation4 + $0x4] sm:$0xf]
    %v53 = vld [vmem:[#allocation4 + $0x8] sm:$0xf]
    %v54 = vld [vmem:[#allocation4 + $0xc] sm:$0xf]
    %v55 = vld [vmem:[#allocation4 + $0x10] sm:$0xf]
    %v56 = vld [vmem:[#allocation4 + $0x14] sm:$0xf]
    %v57 = vld [vmem:[#allocation4 + $0x18] sm:$0xf]
    %v58 = vld [vmem:[#allocation4 + $0x1c] sm:$0xf]
    %v59 = vld [vmem:[#allocation4 + $0x20] sm:$0xf]
    %v60 = vld [vmem:[#allocation4 + $0x24] sm:$0xf]
    %v61 = vld [vmem:[#allocation4 + $0x28] sm:$0xf]
    %v62 = vld [vmem:[#allocation4 + $0x2c] sm:$0xf]
    %v63 = vld [vmem:[#allocation4 + $0x30] sm:$0xf]
    %v64 = vld [vmem:[#allocation7] sm:$0xf]
    %v65 = vld [vmem:[#allocation7 + $0x4] sm:$0xf]
    %v66 = vld [vmem:[#allocation7 + $0x8] sm:$0xf]
    %v67 = vld [vmem:[#allocation7 + $0xc] sm:$0xf]
    %v68 = vld [vmem:[#allocation7 + $0x10] sm:$0xf]
    %v69 = vld [vmem:[#allocation7 + $0x14] sm:$0xf]
    %v70 = vld [vmem:[#allocation7 + $0x18] sm:$0xf]
    %v71 = vld [vmem:[#allocation7 + $0x1c] sm:$0xf]
    %v72 = vld [vmem:[#allocation7 + $0x20] sm:$0xf]
    %v73 = vld [vmem:[#allocation7 + $0x24] sm:$0xf]
    %v74 = vld [vmem:[#allocation7 + $0x28] sm:$0xf]
    %v75 = vld [vmem:[#allocation7 + $0x2c] sm:$0xf]
    %v76 = vld [vmem:[#allocation7 + $0x30] sm:$0xf]
    %v77 = vld [vmem:[#allocation7 + $0x34] sm:$0xf]
    %v78 = vld [vmem:[#allocation7 + $0x38] sm:$0xf]
    %v79 = vld [vmem:[#allocation7 + $0x3c] sm:$0xf]
    %v93 = vunpack.c.l.b16 %v51
    %v94 = vunpack.c.l.b16 %v52
    %v95 = vunpack.c.l.b16 %v53
    %v96 = vunpack.c.l.b16 %v54
    %v97 = vunpack.c.l.b16 %v55
    %v98 = vunpack.c.l.b16 %v56
    %v99 = vunpack.c.l.b16 %v57
    %v100 = vunpack.c.l.b16 %v58
    %v101 = vunpack.c.l.b16 %v59
    %v102 = vunpack.c.l.b16 %v60
    %v103 = vunpack.c.l.b16 %v61
    %v104 = vunpack.c.l.b16 %v62
    %v105 = vunpack.c.l.b16 %v63
    %v106 = vpack.c.b16 %v94, %v93
    %v107 = vpack.c.b16 %v96, %v95
    %v108 = vpack.c.b16 %v98, %v97
    %v109 = vpack.c.b16 %v100, %v99
    %v110 = vpack.c.b16 %v102, %v101
    %v111 = vpack.c.b16 %v104, %v103
    %v112 = vpack.c.b16 %v105, %v105
    %v136 = vunpack.c.l.b16 %v64
    %v137 = vunpack.c.l.b16 %v65
    %v138 = vunpack.c.l.b16 %v66
    %v139 = vunpack.c.l.b16 %v67
    %v140 = vunpack.c.l.b16 %v68
    %v141 = vunpack.c.l.b16 %v69
    %v142 = vunpack.c.l.b16 %v70
    %v143 = vunpack.c.l.b16 %v71
    %v144 = vunpack.c.l.b16 %v72
    %v145 = vunpack.c.l.b16 %v73
    %v146 = vunpack.c.l.b16 %v74
    %v147 = vunpack.c.l.b16 %v75
    %v148 = vunpack.c.l.b16 %v76
    %v149 = vunpack.c.l.b16 %v77
    %v150 = vunpack.c.l.b16 %v78
    %v151 = vunpack.c.l.b16 %v79
    %v152 = vpack.c.b16 %v137, %v136
    %v153 = vpack.c.b16 %v139, %v138
    %v154 = vpack.c.b16 %v141, %v140
    %v155 = vpack.c.b16 %v143, %v142
    %v156 = vpack.c.b16 %v145, %v144
    %v157 = vpack.c.b16 %v147, %v146
    %v158 = vpack.c.b16 %v149, %v148
    %v159 = vpack.c.b16 %v151, %v150
    %168 = vmatprep.subr.bf16.mxu0 0
    %169 = vmatpush1.bf16.msra.mxu0 %v152
    %170 = vmatprep.subr.bf16.mxu0 0
    %171 = vmatpush1.bf16.msra.mxu0 %v153
    %172 = vmatprep.subr.bf16.mxu0 0
    %173 = vmatpush1.bf16.msra.mxu0 %v154
    %174 = vmatprep.subr.bf16.mxu0 0
    %175 = vmatpush1.bf16.msra.mxu0 %v155
    %176 = vmatprep.subr.bf16.mxu0 0
    %177 = vmatpush1.bf16.msra.mxu0 %v156
    %178 = vmatprep.subr.bf16.mxu0 0
    %179 = vmatpush1.bf16.msra.mxu0 %v157
    %180 = vmatprep.subr.bf16.mxu0 0
    %181 = vmatpush1.bf16.msra.mxu0 %v158
    %182 = vmatprep.subr.bf16.mxu0 0
    %183 = vmatpush1.bf16.msra.mxu0 %v159
    %184 = vmatprep.subr.bf16.mxu0 0
    %185 = vmatpush1.bf16.msra.mxu0 0
    %186 = vmatprep.subr.bf16.mxu0 0
    %187 = vmatpush1.bf16.msra.mxu0 0
    %188 = vmatprep.subr.bf16.mxu0 0
    %189 = vmatpush1.bf16.msra.mxu0 0
    %190 = vmatprep.subr.bf16.mxu0 0
    %191 = vmatpush1.bf16.msra.mxu0 0
    %192 = vmatprep.subr.bf16.mxu0 0
    %193 = vmatpush1.bf16.msra.mxu0 0
    %194 = vmatprep.subr.bf16.mxu0 0
    %195 = vmatpush1.bf16.msra.mxu0 0
    %196 = vmatprep.subr.bf16.mxu0 0
    %197 = vmatpush1.bf16.msra.mxu0 0
    %198 = vmatprep.subr.bf16.mxu0 0
    %199 = vmatpush1.bf16.msra.mxu0 0
    %200 = vmatprep.mubr.bf16.mxu0 0
    %201 = vmatmul.mubr.bf16.gmra.mrb[0].mxu0 %v106
    %v202 = vpop.f32.mrb[0].mxu0
    %v203 = vadd.f32 0.0, %v202
    %v204 = vpop.f32.mrb[0].mxu0
    %v205 = vpop.f32.mrb[0].mxu0
    %v206 = vadd.f32 0.0, %v205
    %v207 = vpop.f32.mrb[0].mxu0
    %208 = vmatprep.mubr.bf16.mxu0 0
    %209 = vmatmul.mubr.bf16.gmra.mrb[0].mxu0 %v107
    %v210 = vpop.f32.mrb[0].mxu0
    %v211 = vadd.f32 0.0, %v210
    %v212 = vpop.f32.mrb[0].mxu0
    %v213 = vpop.f32.mrb[0].mxu0
    %v214 = vadd.f32 0.0, %v213
    %v215 = vpop.f32.mrb[0].mxu0
    %216 = vmatprep.mubr.bf16.mxu0 0
    %217 = vmatmul.mubr.bf16.gmra.mrb[0].mxu0 %v108
    %v218 = vpop.f32.mrb[0].mxu0
    %v219 = vadd.f32 0.0, %v218
    %v220 = vpop.f32.mrb[0].mxu0
    %v221 = vpop.f32.mrb[0].mxu0
    %v222 = vadd.f32 0.0, %v221
    %v223 = vpop.f32.mrb[0].mxu0
    %224 = vmatprep.mubr.bf16.mxu0 0
    %225 = vmatmul.mubr.bf16.gmra.mrb[0].mxu0 %v109
    %v226 = vpop.f32.mrb[0].mxu0
    %v227 = vadd.f32 0.0, %v226
    %v228 = vpop.f32.mrb[0].mxu0
    %v229 = vpop.f32.mrb[0].mxu0
    %v230 = vadd.f32 0.0, %v229
    %v231 = vpop.f32.mrb[0].mxu0
    %232 = vmatprep.mubr.bf16.mxu0 0
    %233 = vmatmul.mubr.bf16.gmra.mrb[0].mxu0 %v110
    %v234 = vpop.f32.mrb[0].mxu0
    %v235 = vadd.f32 0.0, %v234
    %v236 = vpop.f32.mrb[0].mxu0
    %v237 = vpop.f32.mrb[0].mxu0
    %v238 = vadd.f32 0.0, %v237
    %v239 = vpop.f32.mrb[0].mxu0
    %240 = vmatprep.mubr.bf16.mxu0 0
    %241 = vmatmul.mubr.bf16.gmra.mrb[0].mxu0 %v111
    %v242 = vpop.f32.mrb[0].mxu0
    %v243 = vadd.f32 0.0, %v242
    %v244 = vpop.f32.mrb[0].mxu0
    %v245 = vpop.f32.mrb[0].mxu0
    %v246 = vadd.f32 0.0, %v245
    %v247 = vpop.f32.mrb[0].mxu0
    %248 = vmatprep.mubr.bf16.mxu0 0
    %249 = vmatmul.mubr.bf16.gmra.mrb[0].mxu0 %v112
    %v250 = vpop.f32.mrb[0].mxu0
    %v251 = vadd.f32 0.0, %v250
    %v252 = vpop.f32.mrb[0].mxu0
    %v253 = vpop.f32.mrb[0].mxu0
    %v254 = vpop.f32.mrb[0].mxu0
    %255 = vdwg.mxu0
    %256 = vst [vmem:[#allocation9] sm:$0xff] %v203
    %257 = vst [vmem:[#allocation9 + $0x8] sm:$0xff] %v206
    %258 = vst [vmem:[#allocation9 + $0x10] sm:$0xff] %v211
    %259 = vst [vmem:[#allocation9 + $0x18] sm:$0xff] %v214
    %260 = vst [vmem:[#allocation9 + $0x20] sm:$0xff] %v219
    %261 = vst [vmem:[#allocation9 + $0x28] sm:$0xff] %v222
    %262 = vst [vmem:[#allocation9 + $0x30] sm:$0xff] %v227
    %263 = vst [vmem:[#allocation9 + $0x38] sm:$0xff] %v230
    %264 = vst [vmem:[#allocation9 + $0x40] sm:$0xff] %v235
    %265 = vst [vmem:[#allocation9 + $0x48] sm:$0xff] %v238
    %266 = vst [vmem:[#allocation9 + $0x50] sm:$0xff] %v243
    %267 = vst [vmem:[#allocation9 + $0x58] sm:$0xff] %v246
    %268 = vst [vmem:[#allocation9 + $0x60] sm:$0xff] %v251
    %p269 = scmp.eq.s32.totalorder 0, 0
    // Predicated region
    $region26: #{tpu_custom_call.1} parent=1 // pred_check
      %p270 = pneg %p269
    $region27: #{tpu_custom_call.1} parent=1 // pred_check_branch
      %272 = sbr.rel (%p270) target = $region29
    $region28: #{tpu_custom_call.1} parent=1 // pred_region
      %273 = vst [vmem:[#allocation2] sm:$0x1] 0.0
      %274 = vst [vmem:[#allocation3] sm:$0x1] 0.0
    $region29: #{tpu_custom_call.1} parent=1 // pred_fallthru
      _
    %v275 = vld [vmem:[#allocation2] sm:$0x1]
    %v276 = vadd.f32 %v203, %v206
    %v277 = vadd.f32 %v276, %v211
    %v278 = vadd.f32 %v277, %v214
    %v279 = vadd.f32 %v278, %v219
    %v280 = vadd.f32 %v279, %v222
    %v281 = vadd.f32 %v280, %v227
    %v282 = vadd.f32 %v281, %v230
    %v283 = vadd.f32 %v282, %v235
    %v284 = vadd.f32 %v283, %v238
    %v285 = vadd.f32 %v284, %v243
    %v286 = vadd.f32 %v285, %v246
    %v287 = vadd.f32 %v286, %v251
    %v288 = vrot.slane %v287, 4
    %v289 = vadd.f32 %v287, %v288
    %v290 = vrot.slane %v289, 2
    %v291 = vadd.f32 %v289, %v290
    %v292 = vrot.slane %v291, 1
    %v293 = vadd.f32 %v291, %v292
    %v294 = vadd.f32 %v275, %v293
    %295 = vst [vmem:[#allocation2] sm:$0x1] %v294
    %v296 = vld [vmem:[#allocation3] sm:$0x1]
    %v297 = vmul.f32 %v203, %v203
    %v298 = vmul.f32 %v206, %v206
    %v299 = vmul.f32 %v211, %v211
    %v300 = vmul.f32 %v214, %v214
    %v301 = vmul.f32 %v219, %v219
    %v302 = vmul.f32 %v222, %v222
    %v303 = vmul.f32 %v227, %v227
    %v304 = vmul.f32 %v230, %v230
    %v305 = vmul.f32 %v235, %v235
    %v306 = vmul.f32 %v238, %v238
    %v307 = vmul.f32 %v243, %v243
    %v308 = vmul.f32 %v246, %v246
    %v309 = vmul.f32 %v251, %v251
    %v310 = vadd.f32 %v297, %v298
    %v311 = vadd.f32 %v310, %v299
    %v312 = vadd.f32 %v311, %v300
    %v313 = vadd.f32 %v312, %v301
    %v314 = vadd.f32 %v313, %v302
    %v315 = vadd.f32 %v314, %v303
    %v316 = vadd.f32 %v315, %v304
    %v317 = vadd.f32 %v316, %v305
    %v318 = vadd.f32 %v317, %v306
    %v319 = vadd.f32 %v318, %v307
    %v320 = vadd.f32 %v319, %v308
    %v321 = vadd.f32 %v320, %v309
    %v322 = vrot.slane %v321, 4
    %v323 = vadd.f32 %v321, %v322
    %v324 = vrot.slane %v323, 2
    %v325 = vadd.f32 %v323, %v324
    %v326 = vrot.slane %v325, 1
    %v327 = vadd.f32 %v325, %v326
    %v328 = vadd.f32 %v296, %v327
    %329 = vst [vmem:[#allocation3] sm:$0x1] %v328
    // Predicated region
    $region30: #{tpu_custom_call.1} parent=1 // pred_check
      %p330 = pneg %p269
    $region31: #{tpu_custom_call.1} parent=1 // pred_check_branch
      %332 = sbr.rel (%p330) target = $region33
    $region32: #{tpu_custom_call.1} parent=1 // pred_region
      %v333 = vld [vmem:[#allocation2] sm:$0x1]
      %v334 = vmul.f32 %v333, 0.010204081
      %v335 = vld [vmem:[#allocation3] sm:$0x1]
      %v336 = vmul.f32 %v335, 0.010204081
      %v337 = vmul.f32 %v334, %v334
      %v338 = vsub.f32 %v336, %v337
      %v339 = vmax.f32 %v338, 0.0
      %v340 = vld [vmem:[%s2] sm:$0x1]
      %v341 = vadd.f32 %v339, 1e-05
      %v342 = vrsqrt.pop %v341
      %v343 = vmul.f32 %v340, %v342
      %344 = vst [vmem:[#allocation10] sm:$0x1] %v343
      %v345 = vld [vmem:[%s3] sm:$0x1]
      %v346 = vmul.f32 %v334, %v343
      %v347 = vsub.f32 %v345, %v346
      %348 = vst [vmem:[#allocation12] sm:$0x1] %v347
    $region33: #{tpu_custom_call.1} parent=1 // pred_fallthru
      _
    // Predicated region
    $region34: #{tpu_custom_call.1} parent=1 // pred_check
      _
    $region35: #{tpu_custom_call.1} parent=1 // pred_check_branch
      %350 = sbr.rel (0) target = $region37
    $region36: #{tpu_custom_call.1} parent=1 // pred_region
      %s352 = ssub.s32 1664, 1664
      %353 = vsyncadd [#allocation6], %s352
      %s354 = sshll.u32 [#allocation9], 4
      %s355 = int_to_ptr.vmem [resolvable:$true] %s354
      %360 = dma.vmem_to_hbm [thread:$0]  %s355, 1664, %s4, [#allocation6], 128, 128, 8
    $region37: #{tpu_custom_call.1} parent=1 // pred_fallthru
      _
    // Predicated region
    $region38: #{tpu_custom_call.1} parent=1 // pred_check
      _
    $region39: #{tpu_custom_call.1} parent=1 // pred_check_branch
      %362 = sbr.rel (0) target = $region41
    $region40: #{tpu_custom_call.1} parent=1 // pred_region
      %s364 = ssub.s32 16, 16
      %365 = vsyncadd [#allocation11], %s364
      %s367 = sshll.u32 [#allocation10], 4
      %s368 = int_to_ptr.vmem [resolvable:$true] %s367
      %370 = dma.vmem_to_hbm [thread:$0]  %s368, 16, %s5, [#allocation11]
    $region41: #{tpu_custom_call.1} parent=1 // pred_fallthru
      _
    // Predicated region
    $region42: #{tpu_custom_call.1} parent=1 // pred_check
      _
    $region43: #{tpu_custom_call.1} parent=1 // pred_check_branch
      %372 = sbr.rel (0) target = $region45
    $region44: #{tpu_custom_call.1} parent=1 // pred_region
      %s374 = ssub.s32 16, 16
      %375 = vsyncadd [#allocation11], %s374
      %s377 = sshll.u32 [#allocation12], 4
      %s378 = int_to_ptr.vmem [resolvable:$true] %s377
      %380 = dma.vmem_to_hbm [thread:$0]  %s378, 16, %s6, [#allocation11]
    $region45: #{tpu_custom_call.1} parent=1 // pred_fallthru
      _
    // Predicated region
    $region46: #{tpu_custom_call.1} parent=1 // pred_check
      _
    $region47: #{tpu_custom_call.1} parent=1 // pred_check_branch
      %382 = sbr.rel (0) target = $region49
    $region48: #{tpu_custom_call.1} parent=1 // pred_region
      %383 = dma.done [#allocation6], 1664
    $region49: #{tpu_custom_call.1} parent=1 // pred_fallthru
      _
    // Predicated region
    $region50: #{tpu_custom_call.1} parent=1 // pred_check
      _
    $region51: #{tpu_custom_call.1} parent=1 // pred_check_branch
      %385 = sbr.rel (0) target = $region53
    $region52: #{tpu_custom_call.1} parent=1 // pred_region
      %386 = dma.done [#allocation11], 16
    $region53: #{tpu_custom_call.1} parent=1 // pred_fallthru
      _
    // Predicated region
    $region54: #{tpu_custom_call.1} parent=1 // pred_check
      _
    $region55: #{tpu_custom_call.1} parent=1 // pred_check_branch
      %388 = sbr.rel (0) target = $region57
    $region56: #{tpu_custom_call.1} parent=1 // pred_region
      %389 = dma.done [#allocation11], 16
    $region57: #{tpu_custom_call.1} parent=1 // pred_fallthru
      _
    %390 = vsyncpa [#allocation5], 1
    %391 = vsyncpa [#allocation8], 1
    %392 = vsyncpa [#allocation6], 1
    %393 = vsyncpa [#allocation11], 1

</llo_original>
